<compile_context>
chip_gen: v7x
topology: tpu7x:2x2x1
jax: 0.10.0
libtpu: 0.0.40
codegen_flags: <defaults>
</compile_context>

<pallas_src>
import jax
import jax.numpy as jnp
from jax.experimental import pallas as pl
from jax.experimental.pallas import tpu as pltpu

LANE = 128
SUBLANE = 8


def _round_up(n, m):
    return -(-n // m) * m


def policy_net_kernel(x_ref, w1_ref, w2_ref, w3_ref, b12_ref, b3_ref, out_ref):
    """One batch tile of softmax(relu(relu(x@W1+b1)@W2+b2)@W3+b3).

    Operands are bf16 (full-rate MXU); accumulation and the bias/ReLU/softmax
    epilogue are f32. Padded action lanes carry a -1e30 sentinel baked into the
    padded b3, so no in-kernel masking is needed.
    """
    x = x_ref[...]                                                     # (T, Xp) bf16

    # fc1 + relu
    h1 = jnp.dot(x, w1_ref[...], preferred_element_type=jnp.float32)
    h1 = jnp.maximum(h1 + b12_ref[0:1, :], 0.0)                        # (T, H) f32

    # fc2 + relu
    h2 = jnp.dot(h1.astype(jnp.bfloat16), w2_ref[...],
                 preferred_element_type=jnp.float32)
    h2 = jnp.maximum(h2 + b12_ref[1:2, :], 0.0)                        # (T, H) f32

    # output layer (padded lanes get logit = 0 + (-1e30) from the padded bias)
    logits = jnp.dot(h2.astype(jnp.bfloat16), w3_ref[...],
                     preferred_element_type=jnp.float32)
    logits = logits + b3_ref[...]                                      # (T, Ap) f32

    # Numerically stable softmax over the (padded) action axis; exact normalization.
    m = jnp.max(logits, axis=-1, keepdims=True)
    e = jnp.exp(logits - m)
    denom = jnp.sum(e, axis=-1, keepdims=True)
    out_ref[...] = e / denom


def policy_net_forward(x, w1, b1, w2, b2, w3, b3, *, tile_b=1024):
    """PolicyNet forward.

    x: (B, input_dims). Weights are (in, out) (PyTorch nn.Linear stores (out, in);
    transpose at parameter-setup time). Biases are (out,).
    Returns (B, num_actions) action probabilities in float32.
    """
    x = jnp.asarray(x, jnp.float32)
    B, d_in = x.shape
    fc1_dims = w1.shape[1]
    fc2_dims = w2.shape[1]
    num_actions = w3.shape[1]

    # Per-dimension lane-dense padding (streamed x / out only pay their own width).
    Xp = _round_up(d_in, LANE)
    H = max(_round_up(fc1_dims, LANE), _round_up(fc2_dims, LANE))
    Ap = _round_up(num_actions, LANE)

    def pad_w(w, rows, cols):
        out = jnp.zeros((rows, cols), jnp.float32)
        out = out.at[: w.shape[0], : w.shape[1]].set(jnp.asarray(w, jnp.float32))
        return out.astype(jnp.bfloat16)

    w1_p = pad_w(w1, Xp, H)                                            # (Xp, H) bf16
    w2_p = pad_w(w2, H, H)                                             # (H,  H) bf16
    w3_p = pad_w(w3, H, Ap)                                            # (H, Ap) bf16

    b12_p = jnp.zeros((2, H), jnp.float32)
    b12_p = b12_p.at[0, :fc1_dims].set(jnp.asarray(b1, jnp.float32).reshape(-1))
    b12_p = b12_p.at[1, :fc2_dims].set(jnp.asarray(b2, jnp.float32).reshape(-1))
    # Bake the softmax padding mask into b3: padded lanes get -1e30.
    b3_p = jnp.full((1, Ap), -1e30, jnp.float32)
    b3_p = b3_p.at[0, :num_actions].set(jnp.asarray(b3, jnp.float32).reshape(-1))

    # ----- batch tiling -----
    B_pad = _round_up(B, SUBLANE)
    tile = _round_up(min(tile_b, B_pad), SUBLANE)

    # Clamp the tile so (double-buffered streams + live f32 intermediates + weights)
    # stay comfortably inside scoped VMEM on every generation.
    bytes_per_row = (Xp * 2 + Ap * 4) * 2           # dbl-buffered x (bf16) + out (f32)
    bytes_per_row += (2 * H + 2 * Ap) * 4           # h1, h2, logits, e (f32)
    weight_bytes = (Xp * H + H * H + H * Ap) * 2 * 2 + (2 * H + Ap) * 4 * 2
    budget = 32 * 1024 * 1024 - weight_bytes
    max_tile = max(SUBLANE, (budget // bytes_per_row) // SUBLANE * SUBLANE)
    tile = min(tile, max_tile)

    # v7x has two TensorCores: guarantee >= 2 grid steps so the "parallel" axis
    # actually shards across both cores whenever there is enough batch.
    if B_pad >= 2 * SUBLANE:
        tile = min(tile, _round_up(B_pad // 2, SUBLANE))

    B_pad = _round_up(B_pad, tile)
    n_tiles = B_pad // tile

    x_p = jnp.zeros((B_pad, Xp), jnp.bfloat16)
    x_p = x_p.at[:B, :d_in].set(x.astype(jnp.bfloat16))

    out = pl.pallas_call(
        policy_net_kernel,
        out_shape=jax.ShapeDtypeStruct((B_pad, Ap), jnp.float32),
        grid=(n_tiles,),
        in_specs=[
            pl.BlockSpec((tile, Xp), lambda i: (i, 0)),   # x: one tile per step
            pl.BlockSpec((Xp, H), lambda i: (0, 0)),      # W1: VMEM-resident
            pl.BlockSpec((H, H), lambda i: (0, 0)),       # W2: VMEM-resident
            pl.BlockSpec((H, Ap), lambda i: (0, 0)),      # W3: VMEM-resident
            pl.BlockSpec((2, H), lambda i: (0, 0)),       # b1/b2: VMEM-resident
            pl.BlockSpec((1, Ap), lambda i: (0, 0)),      # b3 (+pad sentinel)
        ],
        out_specs=pl.BlockSpec((tile, Ap), lambda i: (i, 0)),
        compiler_params=pltpu.CompilerParams(
            dimension_semantics=("parallel",),            # megacore shard on v7x
            vmem_limit_bytes=48 * 1024 * 1024,            # keep big tiles on v5e too
        ),
    )(x_p, w1_p, w2_p, w3_p, b12_p, b3_p)

    return out[:B, :num_actions]


def init_linear_params(key, in_features, out_features):
    """Deterministic init mimicking nn.Linear's U(-1/sqrt(in), 1/sqrt(in)).

    Returns W of shape (in, out) and b of shape (out,).
    """
    kw, kb = jax.random.split(key)
    bound = 1.0 / jnp.sqrt(jnp.float32(in_features))
    w = jax.random.uniform(kw, (in_features, out_features), jnp.float32,
                           minval=-bound, maxval=bound)
    b = jax.random.uniform(kb, (out_features,), jnp.float32,
                           minval=-bound, maxval=bound)
    return w, b


if __name__ == "__main__":
    # Small shapes consistent with the module's __init__ signature.
    input_dims, fc1_dims, fc2_dims, num_actions = 16, 32, 32, 8

    key = jax.random.PRNGKey(0)
    kx, k1, k2, k3, kx2 = jax.random.split(key, 5)

    w1, b1 = init_linear_params(k1, input_dims, fc1_dims)
    w2, b2 = init_linear_params(k2, fc1_dims, fc2_dims)
    w3, b3 = init_linear_params(k3, fc2_dims, num_actions)

    def ref(xx):
        h1 = jnp.maximum(xx @ w1 + b1, 0.0)
        h2 = jnp.maximum(h1 @ w2 + b2, 0.0)
        return jax.nn.softmax(h2 @ w3 + b3, axis=-1)

    # Case 1: tiny batch (single grid step).
    x_small = jax.random.normal(kx, (2, input_dims), jnp.float32)
    p_small = jax.block_until_ready(
        policy_net_forward(x_small, w1, b1, w2, b2, w3, b3))
    assert p_small.shape == (2, num_actions)
    # bf16 operands (f32 accumulate) -> ~1e-2 absolute budget vs f32 reference.
    assert jnp.allclose(p_small, ref(x_small), atol=2e-2, rtol=2e-2)
    assert jnp.allclose(jnp.sum(p_small, axis=-1), 1.0, atol=1e-5)

    # Case 2: batch exercising >= 2 grid steps (v7x megacore path) + row padding.
    x_big = jax.random.normal(kx2, (20, input_dims), jnp.float32)
    p_big = jax.block_until_ready(
        policy_net_forward(x_big, w1, b1, w2, b2, w3, b3))
    assert p_big.shape == (20, num_actions)
    assert jnp.allclose(p_big, ref(x_big), atol=2e-2, rtol=2e-2)
    assert jnp.allclose(jnp.sum(p_big, axis=-1), 1.0, atol=1e-5)

    print("KERNEL_OK")
</pallas_src>

<mosaic_0001>
module attributes {stable_mosaic.version = 11 : i64} {
  func.func @policy_net_kernel(%arg0: i32, %arg1: memref<8x128xbf16, #tpu.memory_space<vmem>>, %arg2: memref<128x128xbf16, #tpu.memory_space<vmem>>, %arg3: memref<128x128xbf16, #tpu.memory_space<vmem>>, %arg4: memref<128x128xbf16, #tpu.memory_space<vmem>>, %arg5: memref<2x128xf32, #tpu.memory_space<vmem>>, %arg6: memref<1x128xf32, #tpu.memory_space<vmem>>, %arg7: memref<8x128xf32, #tpu.memory_space<vmem>>) attributes {dimension_semantics = [#tpu.dimension_semantics<parallel>], iteration_bounds = array<i64: 1>, scalar_prefetch = 0 : i64, scratch_operands = 0 : i64, tpu.core_type = #tpu.core_type<tc>, window_params = [{transform_indices = @transform_0, window_bounds = array<i64: 8, 128>}, {pipeline_mode = #tpu.pipeline_mode<synchronous>, transform_indices = @transform_1, window_bounds = array<i64: 128, 128>}, {pipeline_mode = #tpu.pipeline_mode<synchronous>, transform_indices = @transform_2, window_bounds = array<i64: 128, 128>}, {pipeline_mode = #tpu.pipeline_mode<synchronous>, transform_indices = @transform_3, window_bounds = array<i64: 128, 128>}, {pipeline_mode = #tpu.pipeline_mode<synchronous>, transform_indices = @transform_4, window_bounds = array<i64: 2, 128>}, {pipeline_mode = #tpu.pipeline_mode<synchronous>, transform_indices = @transform_5, window_bounds = array<i64: 1, 128>}, {transform_indices = @transform_6, window_bounds = array<i64: 8, 128>}]} {
    %c0 = arith.constant 0 : index
    %c0_0 = arith.constant 0 : index
    %0 = vector.load %arg1[%c0, %c0_0] : memref<8x128xbf16, #tpu.memory_space<vmem>>, vector<8x128xbf16>
    %c0_1 = arith.constant 0 : index
    %c0_2 = arith.constant 0 : index
    %1 = vector.load %arg2[%c0_1, %c0_2] : memref<128x128xbf16, #tpu.memory_space<vmem>>, vector<128x128xbf16>
    %cst = arith.constant dense<0.000000e+00> : vector<8x128xf32>
    %2 = tpu.matmul %0, %1, %cst {dimension_numbers = #tpu.dot_dimension_numbers<[1], [0], [0], [1], [0, 0, 1, 1], [], []>} : vector<8x128xbf16>, vector<128x128xbf16>, vector<8x128xf32> -> vector<8x128xf32>
    %c0_3 = arith.constant 0 : index
    %c0_4 = arith.constant 0 : index
    %3 = vector.load %arg5[%c0_3, %c0_4] : memref<2x128xf32, #tpu.memory_space<vmem>>, vector<1x128xf32>
    %4 = vector.broadcast %3 : vector<1x128xf32> to vector<8x128xf32>
    %5 = arith.addf %2, %4 : vector<8x128xf32>
    %cst_5 = arith.constant 0.000000e+00 : f32
    %6 = vector.broadcast %cst_5 : f32 to vector<8x128xf32>
    %7 = arith.maximumf %5, %6 : vector<8x128xf32>
    %8 = arith.truncf %7 : vector<8x128xf32> to vector<8x128xbf16>
    %c0_6 = arith.constant 0 : index
    %c0_7 = arith.constant 0 : index
    %9 = vector.load %arg3[%c0_6, %c0_7] : memref<128x128xbf16, #tpu.memory_space<vmem>>, vector<128x128xbf16>
    %cst_8 = arith.constant dense<0.000000e+00> : vector<8x128xf32>
    %10 = tpu.matmul %8, %9, %cst_8 {dimension_numbers = #tpu.dot_dimension_numbers<[1], [0], [0], [1], [0, 0, 1, 1], [], []>} : vector<8x128xbf16>, vector<128x128xbf16>, vector<8x128xf32> -> vector<8x128xf32>
    %c1 = arith.constant 1 : index
    %c0_9 = arith.constant 0 : index
    %11 = vector.load %arg5[%c1, %c0_9] : memref<2x128xf32, #tpu.memory_space<vmem>>, vector<1x128xf32>
    %12 = vector.broadcast %11 : vector<1x128xf32> to vector<8x128xf32>
    %13 = arith.addf %10, %12 : vector<8x128xf32>
    %cst_10 = arith.constant 0.000000e+00 : f32
    %14 = vector.broadcast %cst_10 : f32 to vector<8x128xf32>
    %15 = arith.maximumf %13, %14 : vector<8x128xf32>
    %16 = arith.truncf %15 : vector<8x128xf32> to vector<8x128xbf16>
    %c0_11 = arith.constant 0 : index
    %c0_12 = arith.constant 0 : index
    %17 = vector.load %arg4[%c0_11, %c0_12] : memref<128x128xbf16, #tpu.memory_space<vmem>>, vector<128x128xbf16>
    %cst_13 = arith.constant dense<0.000000e+00> : vector<8x128xf32>
    %18 = tpu.matmul %16, %17, %cst_13 {dimension_numbers = #tpu.dot_dimension_numbers<[1], [0], [0], [1], [0, 0, 1, 1], [], []>} : vector<8x128xbf16>, vector<128x128xbf16>, vector<8x128xf32> -> vector<8x128xf32>
    %c0_14 = arith.constant 0 : index
    %c0_15 = arith.constant 0 : index
    %19 = vector.load %arg6[%c0_14, %c0_15] : memref<1x128xf32, #tpu.memory_space<vmem>>, vector<1x128xf32>
    %20 = vector.broadcast %19 : vector<1x128xf32> to vector<8x128xf32>
    %21 = arith.addf %18, %20 : vector<8x128xf32>
    %cst_16 = arith.constant dense<0xFF800000> : vector<8xf32>
    %22 = vector.multi_reduction <maximumf>, %21, %cst_16 [1] : vector<8x128xf32> to vector<8xf32>
    %23 = vector.shape_cast %22 : vector<8xf32> to vector<8x1xf32>
    %24 = vector.broadcast %23 : vector<8x1xf32> to vector<8x128xf32>
    %25 = arith.subf %21, %24 : vector<8x128xf32>
    %26 = math.exp %25 : vector<8x128xf32>
    %cst_17 = arith.constant dense<0.000000e+00> : vector<8xf32>
    %27 = vector.multi_reduction <add>, %26, %cst_17 [1] : vector<8x128xf32> to vector<8xf32>
    %28 = vector.shape_cast %27 : vector<8xf32> to vector<8x1xf32>
    %29 = vector.broadcast %28 : vector<8x1xf32> to vector<8x128xf32>
    %30 = arith.divf %26, %29 : vector<8x128xf32>
    %c0_18 = arith.constant 0 : index
    %c0_19 = arith.constant 0 : index
    %31 = vector.load %arg7[%c0_18, %c0_19] : memref<8x128xf32, #tpu.memory_space<vmem>>, vector<8x128xf32>
    tpu.vector_store %arg7[%c0_18, %c0_19], %30 {strides = array<i32>} : memref<8x128xf32, #tpu.memory_space<vmem>>, vector<8x128xf32>,
    return
  }
  func.func @transform_0(%arg0: i32) -> (i32, i32) {
    %c0_i32 = arith.constant 0 : i32
    %c0_i32_0 = arith.constant 0 : i32
    return %arg0, %c0_i32 : i32, i32
  }
  func.func @transform_1(%arg0: i32) -> (i32, i32) {
    %c0_i32 = arith.constant 0 : i32
    %c0_i32_0 = arith.constant 0 : i32
    %c0_i32_1 = arith.constant 0 : i32
    return %c0_i32, %c0_i32_0 : i32, i32
  }
  func.func @transform_2(%arg0: i32) -> (i32, i32) {
    %c0_i32 = arith.constant 0 : i32
    %c0_i32_0 = arith.constant 0 : i32
    %c0_i32_1 = arith.constant 0 : i32
    return %c0_i32, %c0_i32_0 : i32, i32
  }
  func.func @transform_3(%arg0: i32) -> (i32, i32) {
    %c0_i32 = arith.constant 0 : i32
    %c0_i32_0 = arith.constant 0 : i32
    %c0_i32_1 = arith.constant 0 : i32
    return %c0_i32, %c0_i32_0 : i32, i32
  }
  func.func @transform_4(%arg0: i32) -> (i32, i32) {
    %c0_i32 = arith.constant 0 : i32
    %c0_i32_0 = arith.constant 0 : i32
    %c0_i32_1 = arith.constant 0 : i32
    return %c0_i32, %c0_i32_0 : i32, i32
  }
  func.func @transform_5(%arg0: i32) -> (i32, i32) {
    %c0_i32 = arith.constant 0 : i32
    %c0_i32_0 = arith.constant 0 : i32
    %c0_i32_1 = arith.constant 0 : i32
    return %c0_i32, %c0_i32_0 : i32, i32
  }
  func.func @transform_6(%arg0: i32) -> (i32, i32) {
    %c0_i32 = arith.constant 0 : i32
    %c0_i32_0 = arith.constant 0 : i32
    return %arg0, %c0_i32 : i32, i32
  }
}

</mosaic_0001>

<llo_original>
// kernel: tpu_custom_call.1
$region0: #{tpu_custom_call.1}
  #allocation0 [shape = 'u32[]', space=smem, size = 0x4, offset = 0x4, fixed_abs, tag = 'smem constant byte address 0x4 - core index']
  #allocation1 [shape = 'u32[144,128]{1,0:T(1,128)}', space=vmem, size = 0x12000, scoped, tag = 'internal scratch']
  %s0 = inlined_call_operand.hbm [shape: bf16[8,128], index: 0, kind: input, shape index: {}]
  %s1 = inlined_call_operand.hbm [shape: bf16[128,128], index: 1, kind: input, shape index: {}]
  %s2 = inlined_call_operand.hbm [shape: bf16[128,128], index: 2, kind: input, shape index: {}]
  %s3 = inlined_call_operand.hbm [shape: bf16[128,128], index: 3, kind: input, shape index: {}]
  %s4 = inlined_call_operand.vmem [shape: f32[2,128], index: 4, kind: input, shape index: {}]
  %s5 = inlined_call_operand.vmem [shape: f32[1,128], index: 5, kind: input, shape index: {}]
  %s6 = inlined_call_operand.hbm [shape: f32[8,128], index: 6, kind: output, shape index: {}]
  %s7 = sld [smem:[#allocation0]]
  $region50: #{tpu_custom_call.1} parent=0
    _
  %s9 = ssub.s32 1, %s7
  %s10 = scalar_select 0, %s9, %s7
  $region1: #{tpu_custom_call.1} parent=0
    #allocation2 [shape = 'u8[2048]{0}', space=vmem, size = 0x800, scoped, tag = 'input window, operand 0, single buffered']
    #allocation3 [shape = 's32[1]{0}', space=sflag, size = 0x4, scoped, tag = 'scoped memory for tpu_custom_call.1']
    #allocation4 [shape = 's32[1]{0}', space=sflag, size = 0x4, scoped, tag = 'scoped memory for tpu_custom_call.1']
    #allocation5 [shape = 'u8[32768]{0}', space=vmem, size = 0x8000, scoped, tag = 'input window, operand 1, single buffered']
    #allocation6 [shape = 's32[1]{0}', space=sflag, size = 0x4, scoped, tag = 'scoped memory for tpu_custom_call.1']
    #allocation7 [shape = 'u8[32768]{0}', space=vmem, size = 0x8000, scoped, tag = 'input window, operand 2, single buffered']
    #allocation8 [shape = 'u8[32768]{0}', space=vmem, size = 0x8000, scoped, tag = 'input window, operand 3, single buffered']
    #allocation9 [shape = 's32[1]{0}', space=sflag, size = 0x4, scoped, tag = 'scoped memory for tpu_custom_call.1']
    #allocation10 [shape = 'u8[4096]{0}', space=vmem, size = 0x1000, scoped, tag = 'output window, operand 0, single buffered']
    %11 = vsyncpa [#allocation3], 0
    %12 = vsyncpa [#allocation6], 0
    %13 = vsyncpa [#allocation9], 0
    %14 = vsyncpa [#allocation4], 0
    // Predicated region
    $region2: #{tpu_custom_call.1} parent=1 // pred_check
      _
    $region3: #{tpu_custom_call.1} parent=1 // pred_check_branch
      %16 = sbr.rel (0) target = $region5
    $region4: #{tpu_custom_call.1} parent=1 // pred_region
      %s18 = ssub.s32 64, 64
      %19 = vsyncadd [#allocation3], %s18
      %s21 = sshll.u32 [#allocation2], 4
      %s22 = int_to_ptr.vmem [resolvable:$true] %s21
      %24 = dma.hbm_to_vmem [thread:$0]  %s0, 64, %s22, [#allocation3]
    $region5: #{tpu_custom_call.1} parent=1 // pred_fallthru
      _
    // Predicated region
    $region6: #{tpu_custom_call.1} parent=1 // pred_check
      _
    $region7: #{tpu_custom_call.1} parent=1 // pred_check_branch
      %26 = sbr.rel (0) target = $region9
    $region8: #{tpu_custom_call.1} parent=1 // pred_region
      %s28 = ssub.s32 1024, 1024
      %29 = vsyncadd [#allocation6], %s28
      %s30 = sshll.u32 [#allocation5], 4
      %s31 = int_to_ptr.vmem [resolvable:$true] %s30
      %36 = dma.hbm_to_vmem [thread:$0]  %s1, 1024, %s31, [#allocation6], 64, 64, 4
    $region9: #{tpu_custom_call.1} parent=1 // pred_fallthru
      _
    // Predicated region
    $region10: #{tpu_custom_call.1} parent=1 // pred_check
      _
    $region11: #{tpu_custom_call.1} parent=1 // pred_check_branch
      %38 = sbr.rel (0) target = $region13
    $region12: #{tpu_custom_call.1} parent=1 // pred_region
      %s40 = ssub.s32 1024, 1024
      %41 = vsyncadd [#allocation6], %s40
      %s42 = sshll.u32 [#allocation7], 4
      %s43 = int_to_ptr.vmem [resolvable:$true] %s42
      %48 = dma.hbm_to_vmem [thread:$0]  %s2, 1024, %s43, [#allocation6], 64, 64, 4
    $region13: #{tpu_custom_call.1} parent=1 // pred_fallthru
      _
    // Predicated region
    $region14: #{tpu_custom_call.1} parent=1 // pred_check
      _
    $region15: #{tpu_custom_call.1} parent=1 // pred_check_branch
      %50 = sbr.rel (0) target = $region17
    $region16: #{tpu_custom_call.1} parent=1 // pred_region
      %s52 = ssub.s32 1024, 1024
      %53 = vsyncadd [#allocation9], %s52
      %s54 = sshll.u32 [#allocation8], 4
      %s55 = int_to_ptr.vmem [resolvable:$true] %s54
      %60 = dma.hbm_to_vmem [thread:$0]  %s3, 1024, %s55, [#allocation9], 64, 64, 4
    $region17: #{tpu_custom_call.1} parent=1 // pred_fallthru
      _
    // Predicated region
    $region18: #{tpu_custom_call.1} parent=1 // pred_check
      _
    $region19: #{tpu_custom_call.1} parent=1 // pred_check_branch
      %62 = sbr.rel (0) target = $region21
    $region20: #{tpu_custom_call.1} parent=1 // pred_region
      _
    $region21: #{tpu_custom_call.1} parent=1 // pred_fallthru
      _
    // Predicated region
    $region22: #{tpu_custom_call.1} parent=1 // pred_check
      _
    $region23: #{tpu_custom_call.1} parent=1 // pred_check_branch
      %64 = sbr.rel (0) target = $region25
    $region24: #{tpu_custom_call.1} parent=1 // pred_region
      _
    $region25: #{tpu_custom_call.1} parent=1 // pred_fallthru
      _
    // Predicated region
    $region26: #{tpu_custom_call.1} parent=1 // pred_check
      _
    $region27: #{tpu_custom_call.1} parent=1 // pred_check_branch
      %66 = sbr.rel (0) target = $region29
    $region28: #{tpu_custom_call.1} parent=1 // pred_region
      %67 = dma.done [#allocation3], 64
    $region29: #{tpu_custom_call.1} parent=1 // pred_fallthru
      _
    // Predicated region
    $region30: #{tpu_custom_call.1} parent=1 // pred_check
      _
    $region31: #{tpu_custom_call.1} parent=1 // pred_check_branch
      %69 = sbr.rel (0) target = $region33
    $region32: #{tpu_custom_call.1} parent=1 // pred_region
      %70 = dma.done [#allocation6], 1024
    $region33: #{tpu_custom_call.1} parent=1 // pred_fallthru
      _
    // Predicated region
    $region34: #{tpu_custom_call.1} parent=1 // pred_check
      _
    $region35: #{tpu_custom_call.1} parent=1 // pred_check_branch
      %72 = sbr.rel (0) target = $region37
    $region36: #{tpu_custom_call.1} parent=1 // pred_region
      %73 = dma.done [#allocation6], 1024
    $region37: #{tpu_custom_call.1} parent=1 // pred_fallthru
      _
    // Predicated region
    $region38: #{tpu_custom_call.1} parent=1 // pred_check
      _
    $region39: #{tpu_custom_call.1} parent=1 // pred_check_branch
      %75 = sbr.rel (0) target = $region41
    $region40: #{tpu_custom_call.1} parent=1 // pred_region
      %76 = dma.done [#allocation9], 1024
    $region41: #{tpu_custom_call.1} parent=1 // pred_fallthru
      _
    %v78 = vld [vmem:[#allocation2] sm:$0xf]
    %v79 = vld [vmem:[#allocation5] sm:$0xf]
    %v80 = vld [vmem:[#allocation5 + $0x4] sm:$0xf]
    %v81 = vld [vmem:[#allocation5 + $0x8] sm:$0xf]
    %v82 = vld [vmem:[#allocation5 + $0xc] sm:$0xf]
    %v83 = vld [vmem:[#allocation5 + $0x10] sm:$0xf]
    %v84 = vld [vmem:[#allocation5 + $0x14] sm:$0xf]
    %v85 = vld [vmem:[#allocation5 + $0x18] sm:$0xf]
    %v86 = vld [vmem:[#allocation5 + $0x1c] sm:$0xf]
    %v87 = vld [vmem:[#allocation5 + $0x20] sm:$0xf]
    %v88 = vld [vmem:[#allocation5 + $0x24] sm:$0xf]
    %v89 = vld [vmem:[#allocation5 + $0x28] sm:$0xf]
    %v90 = vld [vmem:[#allocation5 + $0x2c] sm:$0xf]
    %v91 = vld [vmem:[#allocation5 + $0x30] sm:$0xf]
    %v92 = vld [vmem:[#allocation5 + $0x34] sm:$0xf]
    %v93 = vld [vmem:[#allocation5 + $0x38] sm:$0xf]
    %v94 = vld [vmem:[#allocation5 + $0x3c] sm:$0xf]
    %v95 = vld [vmem:[%s4] sm:$0x1]
    %v96 = vlaneseq
    %v97 = vshrl.u32 %v96, 7
    %v98 = vsub.s32 0, %v97
    %v99 = vrot.slane %v95, %v98
    %v116 = vunpack.c.l.b16 %v79
    %v117 = vunpack.c.l.b16 %v80
    %v118 = vunpack.c.l.b16 %v81
    %v119 = vunpack.c.l.b16 %v82
    %v120 = vunpack.c.l.b16 %v83
    %v121 = vunpack.c.l.b16 %v84
    %v122 = vunpack.c.l.b16 %v85
    %v123 = vunpack.c.l.b16 %v86
    %v124 = vunpack.c.l.b16 %v87
    %v125 = vunpack.c.l.b16 %v88
    %v126 = vunpack.c.l.b16 %v89
    %v127 = vunpack.c.l.b16 %v90
    %v128 = vunpack.c.l.b16 %v91
    %v129 = vunpack.c.l.b16 %v92
    %v130 = vunpack.c.l.b16 %v93
    %v131 = vunpack.c.l.b16 %v94
    %v132 = vpack.c.b16 %v117, %v116
    %v133 = vpack.c.b16 %v119, %v118
    %v134 = vpack.c.b16 %v121, %v120
    %v135 = vpack.c.b16 %v123, %v122
    %v136 = vpack.c.b16 %v125, %v124
    %v137 = vpack.c.b16 %v127, %v126
    %v138 = vpack.c.b16 %v129, %v128
    %v139 = vpack.c.b16 %v131, %v130
    %148 = vmatprep.subr.bf16.mxu0 0
    %149 = vmatpush1.bf16.msra.mxu0 %v132
    %150 = vmatprep.subr.bf16.mxu0 0
    %151 = vmatpush1.bf16.msra.mxu0 %v133
    %152 = vmatprep.subr.bf16.mxu0 0
    %153 = vmatpush1.bf16.msra.mxu0 %v134
    %154 = vmatprep.subr.bf16.mxu0 0
    %155 = vmatpush1.bf16.msra.mxu0 %v135
    %156 = vmatprep.subr.bf16.mxu0 0
    %157 = vmatpush1.bf16.msra.mxu0 %v136
    %158 = vmatprep.subr.bf16.mxu0 0
    %159 = vmatpush1.bf16.msra.mxu0 %v137
    %160 = vmatprep.subr.bf16.mxu0 0
    %161 = vmatpush1.bf16.msra.mxu0 %v138
    %162 = vmatprep.subr.bf16.mxu0 0
    %163 = vmatpush1.bf16.msra.mxu0 %v139
    %164 = vmatprep.subr.bf16.mxu0 0
    %165 = vmatpush1.bf16.msra.mxu0 0
    %166 = vmatprep.subr.bf16.mxu0 0
    %167 = vmatpush1.bf16.msra.mxu0 0
    %168 = vmatprep.subr.bf16.mxu0 0
    %169 = vmatpush1.bf16.msra.mxu0 0
    %170 = vmatprep.subr.bf16.mxu0 0
    %171 = vmatpush1.bf16.msra.mxu0 0
    %172 = vmatprep.subr.bf16.mxu0 0
    %173 = vmatpush1.bf16.msra.mxu0 0
    %174 = vmatprep.subr.bf16.mxu0 0
    %175 = vmatpush1.bf16.msra.mxu0 0
    %176 = vmatprep.subr.bf16.mxu0 0
    %177 = vmatpush1.bf16.msra.mxu0 0
    %178 = vmatprep.subr.bf16.mxu0 0
    %179 = vmatpush1.bf16.msra.mxu0 0
    %180 = vmatprep.mubr.bf16.mxu0 0
    %181 = vmatmul.mubr.bf16.gmra.mrb[0].mxu0 %v78
    %v182 = vpop.f32.mrb[0].mxu0
    %v183 = vadd.f32 %v99, %v182
    %v184 = vpop.f32.mrb[0].mxu0
    %v185 = vpop.f32.mrb[0].mxu0
    %v186 = vpop.f32.mrb[0].mxu0
    %187 = vdwg.mxu0
    %v188 = vmax.f32 %v183, 0.0
    %v189 = vpack.c.bf16 %v188, %v188
    %v190 = vld [vmem:[#allocation7] sm:$0xf]
    %v191 = vld [vmem:[#allocation7 + $0x4] sm:$0xf]
    %v192 = vld [vmem:[#allocation7 + $0x8] sm:$0xf]
    %v193 = vld [vmem:[#allocation7 + $0xc] sm:$0xf]
    %v194 = vld [vmem:[#allocation7 + $0x10] sm:$0xf]
    %v195 = vld [vmem:[#allocation7 + $0x14] sm:$0xf]
    %v196 = vld [vmem:[#allocation7 + $0x18] sm:$0xf]
    %v197 = vld [vmem:[#allocation7 + $0x1c] sm:$0xf]
    %v198 = vld [vmem:[#allocation7 + $0x20] sm:$0xf]
    %v199 = vld [vmem:[#allocation7 + $0x24] sm:$0xf]
    %v200 = vld [vmem:[#allocation7 + $0x28] sm:$0xf]
    %v201 = vld [vmem:[#allocation7 + $0x2c] sm:$0xf]
    %v202 = vld [vmem:[#allocation7 + $0x30] sm:$0xf]
    %v203 = vld [vmem:[#allocation7 + $0x34] sm:$0xf]
    %v204 = vld [vmem:[#allocation7 + $0x38] sm:$0xf]
    %v205 = vld [vmem:[#allocation7 + $0x3c] sm:$0xf]
    %v206 = vld [vmem:[%s4 + $0x1] sm:$0x1]
    %v207 = vlaneseq
    %v208 = vshrl.u32 %v207, 7
    %v209 = vsub.s32 0, %v208
    %v210 = vrot.slane %v206, %v209
    %v227 = vunpack.c.l.b16 %v190
    %v228 = vunpack.c.l.b16 %v191
    %v229 = vunpack.c.l.b16 %v192
    %v230 = vunpack.c.l.b16 %v193
    %v231 = vunpack.c.l.b16 %v194
    %v232 = vunpack.c.l.b16 %v195
    %v233 = vunpack.c.l.b16 %v196
    %v234 = vunpack.c.l.b16 %v197
    %v235 = vunpack.c.l.b16 %v198
    %v236 = vunpack.c.l.b16 %v199
    %v237 = vunpack.c.l.b16 %v200
    %v238 = vunpack.c.l.b16 %v201
    %v239 = vunpack.c.l.b16 %v202
    %v240 = vunpack.c.l.b16 %v203
    %v241 = vunpack.c.l.b16 %v204
    %v242 = vunpack.c.l.b16 %v205
    %v243 = vpack.c.b16 %v228, %v227
    %v244 = vpack.c.b16 %v230, %v229
    %v245 = vpack.c.b16 %v232, %v231
    %v246 = vpack.c.b16 %v234, %v233
    %v247 = vpack.c.b16 %v236, %v235
    %v248 = vpack.c.b16 %v238, %v237
    %v249 = vpack.c.b16 %v240, %v239
    %v250 = vpack.c.b16 %v242, %v241
    %259 = vmatprep.subr.bf16.mxu0 0
    %260 = vmatpush1.bf16.msra.mxu0 %v243
    %261 = vmatprep.subr.bf16.mxu0 0
    %262 = vmatpush1.bf16.msra.mxu0 %v244
    %263 = vmatprep.subr.bf16.mxu0 0
    %264 = vmatpush1.bf16.msra.mxu0 %v245
    %265 = vmatprep.subr.bf16.mxu0 0
    %266 = vmatpush1.bf16.msra.mxu0 %v246
    %267 = vmatprep.subr.bf16.mxu0 0
    %268 = vmatpush1.bf16.msra.mxu0 %v247
    %269 = vmatprep.subr.bf16.mxu0 0
    %270 = vmatpush1.bf16.msra.mxu0 %v248
    %271 = vmatprep.subr.bf16.mxu0 0
    %272 = vmatpush1.bf16.msra.mxu0 %v249
    %273 = vmatprep.subr.bf16.mxu0 0
    %274 = vmatpush1.bf16.msra.mxu0 %v250
    %275 = vmatprep.subr.bf16.mxu0 0
    %276 = vmatpush1.bf16.msra.mxu0 0
    %277 = vmatprep.subr.bf16.mxu0 0
    %278 = vmatpush1.bf16.msra.mxu0 0
    %279 = vmatprep.subr.bf16.mxu0 0
    %280 = vmatpush1.bf16.msra.mxu0 0
    %281 = vmatprep.subr.bf16.mxu0 0
    %282 = vmatpush1.bf16.msra.mxu0 0
    %283 = vmatprep.subr.bf16.mxu0 0
    %284 = vmatpush1.bf16.msra.mxu0 0
    %285 = vmatprep.subr.bf16.mxu0 0
    %286 = vmatpush1.bf16.msra.mxu0 0
    %287 = vmatprep.subr.bf16.mxu0 0
    %288 = vmatpush1.bf16.msra.mxu0 0
    %289 = vmatprep.subr.bf16.mxu0 0
    %290 = vmatpush1.bf16.msra.mxu0 0
    %291 = vmatprep.mubr.bf16.mxu0 0
    %292 = vmatmul.mubr.bf16.gmra.mrb[0].mxu0 %v189
    %v293 = vpop.f32.mrb[0].mxu0
    %v294 = vadd.f32 %v210, %v293
    %v295 = vpop.f32.mrb[0].mxu0
    %v296 = vpop.f32.mrb[0].mxu0
    %v297 = vpop.f32.mrb[0].mxu0
    %298 = vdwg.mxu0
    %v299 = vmax.f32 %v294, 0.0
    %v300 = vpack.c.bf16 %v299, %v299
    %v301 = vld [vmem:[#allocation8] sm:$0xf]
    %v302 = vld [vmem:[#allocation8 + $0x4] sm:$0xf]
    %v303 = vld [vmem:[#allocation8 + $0x8] sm:$0xf]
    %v304 = vld [vmem:[#allocation8 + $0xc] sm:$0xf]
    %v305 = vld [vmem:[#allocation8 + $0x10] sm:$0xf]
    %v306 = vld [vmem:[#allocation8 + $0x14] sm:$0xf]
    %v307 = vld [vmem:[#allocation8 + $0x18] sm:$0xf]
    %v308 = vld [vmem:[#allocation8 + $0x1c] sm:$0xf]
    %v309 = vld [vmem:[#allocation8 + $0x20] sm:$0xf]
    %v310 = vld [vmem:[#allocation8 + $0x24] sm:$0xf]
    %v311 = vld [vmem:[#allocation8 + $0x28] sm:$0xf]
    %v312 = vld [vmem:[#allocation8 + $0x2c] sm:$0xf]
    %v313 = vld [vmem:[#allocation8 + $0x30] sm:$0xf]
    %v314 = vld [vmem:[#allocation8 + $0x34] sm:$0xf]
    %v315 = vld [vmem:[#allocation8 + $0x38] sm:$0xf]
    %v316 = vld [vmem:[#allocation8 + $0x3c] sm:$0xf]
    %v317 = vld [vmem:[%s5] sm:$0x1]
    %v319 = vlaneseq
    %v320 = vshrl.u32 %v319, 7
    %v321 = vsub.s32 0, %v320
    %v322 = vrot.slane %v317, %v321
    %v340 = vunpack.c.l.b16 %v301
    %v341 = vunpack.c.l.b16 %v302
    %v342 = vunpack.c.l.b16 %v303
    %v343 = vunpack.c.l.b16 %v304
    %v344 = vunpack.c.l.b16 %v305
    %v345 = vunpack.c.l.b16 %v306
    %v346 = vunpack.c.l.b16 %v307
    %v347 = vunpack.c.l.b16 %v308
    %v348 = vunpack.c.l.b16 %v309
    %v349 = vunpack.c.l.b16 %v310
    %v350 = vunpack.c.l.b16 %v311
    %v351 = vunpack.c.l.b16 %v312
    %v352 = vunpack.c.l.b16 %v313
    %v353 = vunpack.c.l.b16 %v314
    %v354 = vunpack.c.l.b16 %v315
    %v355 = vunpack.c.l.b16 %v316
    %v356 = vpack.c.b16 %v341, %v340
    %v357 = vpack.c.b16 %v343, %v342
    %v358 = vpack.c.b16 %v345, %v344
    %v359 = vpack.c.b16 %v347, %v346
    %v360 = vpack.c.b16 %v349, %v348
    %v361 = vpack.c.b16 %v351, %v350
    %v362 = vpack.c.b16 %v353, %v352
    %v363 = vpack.c.b16 %v355, %v354
    %372 = vmatprep.subr.bf16.mxu0 0
    %373 = vmatpush1.bf16.msra.mxu0 %v356
    %374 = vmatprep.subr.bf16.mxu0 0
    %375 = vmatpush1.bf16.msra.mxu0 %v357
    %376 = vmatprep.subr.bf16.mxu0 0
    %377 = vmatpush1.bf16.msra.mxu0 %v358
    %378 = vmatprep.subr.bf16.mxu0 0
    %379 = vmatpush1.bf16.msra.mxu0 %v359
    %380 = vmatprep.subr.bf16.mxu0 0
    %381 = vmatpush1.bf16.msra.mxu0 %v360
    %382 = vmatprep.subr.bf16.mxu0 0
    %383 = vmatpush1.bf16.msra.mxu0 %v361
    %384 = vmatprep.subr.bf16.mxu0 0
    %385 = vmatpush1.bf16.msra.mxu0 %v362
    %386 = vmatprep.subr.bf16.mxu0 0
    %387 = vmatpush1.bf16.msra.mxu0 %v363
    %388 = vmatprep.subr.bf16.mxu0 0
    %389 = vmatpush1.bf16.msra.mxu0 0
    %390 = vmatprep.subr.bf16.mxu0 0
    %391 = vmatpush1.bf16.msra.mxu0 0
    %392 = vmatprep.subr.bf16.mxu0 0
    %393 = vmatpush1.bf16.msra.mxu0 0
    %394 = vmatprep.subr.bf16.mxu0 0
    %395 = vmatpush1.bf16.msra.mxu0 0
    %396 = vmatprep.subr.bf16.mxu0 0
    %397 = vmatpush1.bf16.msra.mxu0 0
    %398 = vmatprep.subr.bf16.mxu0 0
    %399 = vmatpush1.bf16.msra.mxu0 0
    %400 = vmatprep.subr.bf16.mxu0 0
    %401 = vmatpush1.bf16.msra.mxu0 0
    %402 = vmatprep.subr.bf16.mxu0 0
    %403 = vmatpush1.bf16.msra.mxu0 0
    %404 = vmatprep.mubr.bf16.mxu0 0
    %405 = vmatmul.mubr.bf16.gmra.mrb[0].mxu0 %v300
    %v406 = vpop.f32.mrb[0].mxu0
    %v407 = vadd.f32 %v322, %v406
    %v408 = vpop.f32.mrb[0].mxu0
    %v409 = vpop.f32.mrb[0].mxu0
    %v410 = vpop.f32.mrb[0].mxu0
    %411 = vdwg.mxu0
    %412 = vmax.xlane.f32.xlu0 %v407
    %v413 = vpop.xlane.xlu0 %412
    %v414 = vsub.f32 %v407, %v413
    %v415 = vmul.f32 %v414, 1.442695
    %v416 = vpow.pop %v415
    %417 = vadd.xlane.f32.xlu0 %v416
    %v418 = vpop.xlane.xlu0 %417
    %v419 = vrcp.pop %v418
    %v420 = vmul.f32 %v416, %v419
    %421 = vst [vmem:[#allocation10] sm:$0xff] %v420
    // Predicated region
    $region42: #{tpu_custom_call.1} parent=1 // pred_check
      _
    $region43: #{tpu_custom_call.1} parent=1 // pred_check_branch
      %423 = sbr.rel (0) target = $region45
    $region44: #{tpu_custom_call.1} parent=1 // pred_region
      %s425 = ssub.s32 128, 128
      %426 = vsyncadd [#allocation4], %s425
      %s428 = sshll.u32 [#allocation10], 4
      %s429 = int_to_ptr.vmem [resolvable:$true] %s428
      %431 = dma.vmem_to_hbm [thread:$0]  %s429, 128, %s6, [#allocation4]
    $region45: #{tpu_custom_call.1} parent=1 // pred_fallthru
      _
    // Predicated region
    $region46: #{tpu_custom_call.1} parent=1 // pred_check
      _
    $region47: #{tpu_custom_call.1} parent=1 // pred_check_branch
      %433 = sbr.rel (0) target = $region49
    $region48: #{tpu_custom_call.1} parent=1 // pred_region
      %434 = dma.done [#allocation4], 128
    $region49: #{tpu_custom_call.1} parent=1 // pred_fallthru
      _
    %435 = vsyncpa [#allocation3], 1
    %436 = vsyncpa [#allocation6], 1
    %437 = vsyncpa [#allocation9], 1
    %438 = vsyncpa [#allocation4], 1

</llo_original>
